<compile_context>
chip_gen: v6e
topology: v6e:2x2x1
jax: 0.10.0
libtpu: 0.0.40
codegen_flags: <defaults>
</compile_context>

<pallas_src>
import functools

import jax
import jax.numpy as jnp
from jax import lax
from jax.experimental import pallas as pl
from jax.experimental.pallas import tpu as pltpu


def _rmsnorm_kernel(x_ref, g_ref, o_ref, *, eps: float, inv_d: float):
    # x_ref: (tile_rows, d_model) block; g_ref: (1, d_model); o_ref like x_ref.
    x = x_ref[...]
    xf = x.astype(jnp.float32)
    # Sum of squares in f32 (matches PyTorch's f32 compute path).
    ss = jnp.sum(xf * xf, axis=-1, keepdims=True)          # (tile_rows, 1)
    # One rsqrt per row (EUP), then cheap broadcast multiplies (VPU).
    inv = lax.rsqrt(ss * inv_d + eps)                       # (tile_rows, 1)
    g = g_ref[...].astype(jnp.float32)                      # (1, d_model)
    o_ref[...] = (xf * inv * g).astype(o_ref.dtype)


def _round_up(x: int, m: int) -> int:
    return (x + m - 1) // m * m


def _choose_tile_rows(n_rows: int, d_model: int,
                      target_elems: int = 1 << 20, max_rows: int = 2048) -> int:
    """Pick the biggest row tile that keeps ~1M elements per block.

    ~1M elements -> 2 MiB bf16 / 4 MiB f32 per buffer; with double-buffered
    input + output plus f32 temporaries this stays well inside a 48 MiB scoped
    VMEM limit on every generation (including v7x's 64 MiB physical VMEM).
    """
    rows = (target_elems // max(d_model, 1)) // 8 * 8
    rows = max(8, min(max_rows, rows))
    # No point in a block larger than the (8-rounded) array.
    rows = min(rows, _round_up(max(n_rows, 1), 8))
    return max(rows, 8)


def rmsnorm(x: jax.Array, g: jax.Array, eps: float = 1e-5, *,
            tile_rows: int | None = None) -> jax.Array:
    """RMSNorm over the last axis; matches the PyTorch module's forward."""
    orig_shape = x.shape
    d_model = orig_shape[-1]
    assert g.shape == (d_model,)

    # Flatten leading dims into rows. No padding: the ragged last block (if
    # any) is handled by Pallas; pad rows only affect their own (discarded)
    # outputs because the reduction is row-wise.
    x2 = x.reshape(-1, d_model)
    n_rows = x2.shape[0]

    if tile_rows is None:
        tile_rows = _choose_tile_rows(n_rows, d_model)
    tile_rows = max(8, (tile_rows // 8) * 8)

    g2 = g.reshape(1, d_model)

    kernel = functools.partial(_rmsnorm_kernel, eps=float(eps),
                               inv_d=1.0 / float(d_model))

    out = pl.pallas_call(
        kernel,
        out_shape=jax.ShapeDtypeStruct((n_rows, d_model), x.dtype),
        grid_spec=pltpu.PrefetchScalarGridSpec(
            num_scalar_prefetch=0,
            grid=(pl.cdiv(n_rows, tile_rows),),
            in_specs=[
                pl.BlockSpec((tile_rows, d_model), lambda i: (i, 0)),
                pl.BlockSpec((1, d_model), lambda i: (0, 0)),
            ],
            out_specs=pl.BlockSpec((tile_rows, d_model), lambda i: (i, 0)),
        ),
        compiler_params=pltpu.CompilerParams(
            dimension_semantics=("parallel",),
            vmem_limit_bytes=48 << 20,
        ),
    )(x2, g2)

    return out.reshape(orig_shape)


def rmsnorm_ref(x: jax.Array, g: jax.Array, eps: float = 1e-5) -> jax.Array:
    x_dtype = x.dtype
    xf = x.astype(jnp.float32)
    d_model = x.shape[-1]
    x_rms = jnp.sqrt(jnp.sum(xf * xf, axis=-1, keepdims=True) / d_model + eps)
    return ((xf / x_rms) * g.astype(jnp.float32)).astype(x_dtype)


if __name__ == "__main__":
    key = jax.random.PRNGKey(0)
    batch, seq, d_model = 2, 8, 128
    eps = 1e-5

    kx, kg = jax.random.split(key)
    x = jax.random.normal(kx, (batch, seq, d_model), dtype=jnp.bfloat16)
    # Module initializes g = ones(d_model); perturb deterministically so the
    # scale path is actually exercised.
    g = jnp.ones((d_model,), dtype=jnp.float32) + 0.01 * jax.random.normal(
        kg, (d_model,), dtype=jnp.float32
    )

    out = rmsnorm(x, g, eps=eps)
    out = jax.block_until_ready(out)

    ref = rmsnorm_ref(x, g, eps=eps)
    assert out.shape == x.shape and out.dtype == x.dtype
    err = jnp.max(jnp.abs(out.astype(jnp.float32) - ref.astype(jnp.float32)))
    assert float(err) < 1e-2, f"max abs err {float(err)}"

    print("KERNEL_OK")
</pallas_src>

<mosaic_0001>
module attributes {stable_mosaic.version = 11 : i64} {
  func.func @_rmsnorm_kernel(%arg0: i32, %arg1: memref<16x128xbf16, #tpu.memory_space<vmem>>, %arg2: memref<1x128xf32, #tpu.memory_space<vmem>>, %arg3: memref<16x128xbf16, #tpu.memory_space<vmem>>) attributes {dimension_semantics = [#tpu.dimension_semantics<parallel>], iteration_bounds = array<i64: 1>, scalar_prefetch = 0 : i64, scratch_operands = 0 : i64, tpu.core_type = #tpu.core_type<tc>, window_params = [{transform_indices = @transform_0, window_bounds = array<i64: 16, 128>}, {pipeline_mode = #tpu.pipeline_mode<synchronous>, transform_indices = @transform_1, window_bounds = array<i64: 1, 128>}, {transform_indices = @transform_2, window_bounds = array<i64: 16, 128>}]} {
    %c0 = arith.constant 0 : index
    %c0_0 = arith.constant 0 : index
    %0 = vector.load %arg1[%c0, %c0_0] : memref<16x128xbf16, #tpu.memory_space<vmem>>, vector<16x128xbf16>
    %1 = arith.extf %0 : vector<16x128xbf16> to vector<16x128xf32>
    %2 = arith.mulf %1, %1 : vector<16x128xf32>
    %cst = arith.constant dense<0.000000e+00> : vector<16xf32>
    %3 = vector.multi_reduction <add>, %2, %cst [1] : vector<16x128xf32> to vector<16xf32>
    %4 = vector.shape_cast %3 : vector<16xf32> to vector<16x1xf32>
    %cst_1 = arith.constant 7.812500e-03 : f32
    %5 = vector.broadcast %cst_1 : f32 to vector<16x1xf32>
    %6 = arith.mulf %4, %5 : vector<16x1xf32>
    %cst_2 = arith.constant 9.99999974E-6 : f32
    %7 = vector.broadcast %cst_2 : f32 to vector<16x1xf32>
    %8 = arith.addf %6, %7 : vector<16x1xf32>
    %9 = math.rsqrt %8 : vector<16x1xf32>
    %c0_3 = arith.constant 0 : index
    %c0_4 = arith.constant 0 : index
    %10 = vector.load %arg2[%c0_3, %c0_4] : memref<1x128xf32, #tpu.memory_space<vmem>>, vector<1x128xf32>
    %11 = vector.broadcast %9 : vector<16x1xf32> to vector<16x128xf32>
    %12 = arith.mulf %1, %11 : vector<16x128xf32>
    %13 = vector.broadcast %10 : vector<1x128xf32> to vector<16x128xf32>
    %14 = arith.mulf %12, %13 : vector<16x128xf32>
    %15 = arith.truncf %14 : vector<16x128xf32> to vector<16x128xbf16>
    %c0_5 = arith.constant 0 : index
    %c0_6 = arith.constant 0 : index
    %16 = vector.load %arg3[%c0_5, %c0_6] : memref<16x128xbf16, #tpu.memory_space<vmem>>, vector<16x128xbf16>
    tpu.vector_store %arg3[%c0_5, %c0_6], %15 {strides = array<i32>} : memref<16x128xbf16, #tpu.memory_space<vmem>>, vector<16x128xbf16>,
    return
  }
  func.func @transform_0(%arg0: i32) -> (i32, i32) {
    %c0_i32 = arith.constant 0 : i32
    %c0_i32_0 = arith.constant 0 : i32
    return %arg0, %c0_i32 : i32, i32
  }
  func.func @transform_1(%arg0: i32) -> (i32, i32) {
    %c0_i32 = arith.constant 0 : i32
    %c0_i32_0 = arith.constant 0 : i32
    %c0_i32_1 = arith.constant 0 : i32
    return %c0_i32, %c0_i32_0 : i32, i32
  }
  func.func @transform_2(%arg0: i32) -> (i32, i32) {
    %c0_i32 = arith.constant 0 : i32
    %c0_i32_0 = arith.constant 0 : i32
    return %arg0, %c0_i32 : i32, i32
  }
}

</mosaic_0001>

<llo_original>
// kernel: tpu_custom_call.1
$region0: #{tpu_custom_call.1}
  #allocation0 [shape = 'u32[]', space=smem, size = 0x4, offset = 0x4, fixed_abs, tag = 'smem constant byte address 0x4 - core index']
  #allocation1 [shape = 'u32[144,128]{1,0:T(1,128)}', space=vmem, size = 0x12000, scoped, tag = 'internal scratch']
  %s0 = inlined_call_operand.hbm [shape: bf16[16,128], index: 0, kind: input, shape index: {}]
  %s1 = inlined_call_operand.vmem [shape: f32[1,128], index: 1, kind: input, shape index: {}]
  %s2 = inlined_call_operand.hbm [shape: bf16[16,128], index: 2, kind: output, shape index: {}]
  %s3 = sld [smem:[#allocation0]]
  $region22: #{tpu_custom_call.1} parent=0
    _
  %s5 = ssub.s32 1, %s3
  %s6 = scalar_select 0, %s5, %s3
  $region1: #{tpu_custom_call.1} parent=0
    #allocation2 [shape = 'u8[4096]{0}', space=vmem, size = 0x1000, scoped, tag = 'input window, operand 0, single buffered']
    #allocation3 [shape = 's32[1]{0}', space=sflag, size = 0x4, scoped, tag = 'scoped memory for tpu_custom_call.1']
    #allocation4 [shape = 's32[1]{0}', space=sflag, size = 0x4, scoped, tag = 'scoped memory for tpu_custom_call.1']
    #allocation5 [shape = 'u8[4096]{0}', space=vmem, size = 0x1000, scoped, tag = 'output window, operand 0, single buffered']
    %7 = vsyncpa [#allocation3], 0
    %8 = vsyncpa [#allocation4], 0
    // Predicated region
    $region2: #{tpu_custom_call.1} parent=1 // pred_check
      _
    $region3: #{tpu_custom_call.1} parent=1 // pred_check_branch
      %10 = sbr.rel (0) target = $region5
    $region4: #{tpu_custom_call.1} parent=1 // pred_region
      %s12 = ssub.s32 128, 128
      %13 = vsyncadd [#allocation3], %s12
      %s14 = sshll.u32 [#allocation2], 4
      %s15 = int_to_ptr.vmem [resolvable:$true] %s14
      %20 = dma.hbm_to_vmem [thread:$0]  %s0, 128, %s15, [#allocation3], 64, 64, 4
    $region5: #{tpu_custom_call.1} parent=1 // pred_fallthru
      _
    // Predicated region
    $region6: #{tpu_custom_call.1} parent=1 // pred_check
      _
    $region7: #{tpu_custom_call.1} parent=1 // pred_check_branch
      %22 = sbr.rel (0) target = $region9
    $region8: #{tpu_custom_call.1} parent=1 // pred_region
      _
    $region9: #{tpu_custom_call.1} parent=1 // pred_fallthru
      _
    // Predicated region
    $region10: #{tpu_custom_call.1} parent=1 // pred_check
      _
    $region11: #{tpu_custom_call.1} parent=1 // pred_check_branch
      %24 = sbr.rel (0) target = $region13
    $region12: #{tpu_custom_call.1} parent=1 // pred_region
      %25 = dma.done [#allocation3], 128
    $region13: #{tpu_custom_call.1} parent=1 // pred_fallthru
      _
    %v26 = vld [vmem:[#allocation2] sm:$0xf]
    %v27 = vld [vmem:[#allocation2 + $0x4] sm:$0xf]
    %v28 = vunpack.c.l.bf16 %v26
    %v29 = vunpack.c.l.bf16 %v27
    %v30 = vmul.f32 %v28, %v28
    %v31 = vmul.f32 %v29, %v29
    %32 = vadd.xlane.f32.xlu0 %v30
    %v33 = vpop.xlane.xlu0 %32
    %34 = vadd.xlane.f32.xlu0 %v31
    %v35 = vpop.xlane.xlu0 %34
    %v36 = vmul.f32 %v33, 0.0078125
    %v37 = vmul.f32 %v35, 0.0078125
    %v38 = vadd.f32 %v36, 1e-05
    %v39 = vadd.f32 %v37, 1e-05
    %v40 = vrsqrt.pop %v38
    %v41 = vrsqrt.pop %v39
    %v42 = vld [vmem:[%s1] sm:$0x1]
    %v43 = vmul.f32 %v28, %v40
    %v44 = vmul.f32 %v29, %v41
    %v46 = vlaneseq
    %v47 = vshrl.u32 %v46, 7
    %v48 = vsub.s32 0, %v47
    %v49 = vrot.slane %v42, %v48
    %v51 = vmul.f32 %v43, %v49
    %v52 = vmul.f32 %v44, %v49
    %v53 = vpack.c.bf16 %v52, %v51
    %v55 = vunpack.c.l.b16 %v53
    %v56 = vunpack.c.h.b16 %v53
    %v57 = vpack.c.b16 %v55, %v55
    %v58 = vpack.c.b16 %v56, %v56
    %61 = vst [vmem:[#allocation5] sm:$0xf] %v57
    %62 = vst [vmem:[#allocation5 + $0x4] sm:$0xf] %v58
    // Predicated region
    $region14: #{tpu_custom_call.1} parent=1 // pred_check
      _
    $region15: #{tpu_custom_call.1} parent=1 // pred_check_branch
      %64 = sbr.rel (0) target = $region17
    $region16: #{tpu_custom_call.1} parent=1 // pred_region
      %s66 = ssub.s32 128, 128
      %67 = vsyncadd [#allocation4], %s66
      %s68 = sshll.u32 [#allocation5], 4
      %s69 = int_to_ptr.vmem [resolvable:$true] %s68
      %74 = dma.vmem_to_hbm [thread:$0]  %s69, 128, %s2, [#allocation4], 64, 64, 4
    $region17: #{tpu_custom_call.1} parent=1 // pred_fallthru
      _
    // Predicated region
    $region18: #{tpu_custom_call.1} parent=1 // pred_check
      _
    $region19: #{tpu_custom_call.1} parent=1 // pred_check_branch
      %76 = sbr.rel (0) target = $region21
    $region20: #{tpu_custom_call.1} parent=1 // pred_region
      %77 = dma.done [#allocation4], 128
    $region21: #{tpu_custom_call.1} parent=1 // pred_fallthru
      _
    %78 = vsyncpa [#allocation3], 1
    %79 = vsyncpa [#allocation4], 1

</llo_original>
